<compile_context>
chip_gen: v5e
topology: v5e:2x2
jax: 0.10.0
libtpu: 0.0.40
codegen_flags: <defaults>
</compile_context>

<pallas_src>
import jax
import jax.numpy as jnp
from jax.experimental import pallas as pl
from jax.experimental.pallas import tpu as pltpu


LANE = 512            # lane-dense width (multiple of 128)
MAX_TILE_ROWS = 1024  # 1024*512*4 B = 2 MiB/buffer; 2 ops x 2 bufs = 8 MiB live VMEM
MIN_GRID_STEPS = 4    # give v7x's 2 TCs >= 2 steps each and keep the pipeline busy
SMALL_N_BYPASS = 32768  # below this, a fused XLA elementwise op wins


def _round_up(v, m):
    return -(-v // m) * m


def linear_regression_kernel(wb_ref, x_ref, o_ref):
    # wb_ref: (2,) SMEM -> [w, b]; x_ref / o_ref: (tile_rows, LANE) VMEM tiles.
    w = wb_ref[0]
    b = wb_ref[1]
    o_ref[...] = x_ref[...] * w + b


def linear_regression_forward(x, weight, bias, *, min_pallas_elements=SMALL_N_BYPASS):
    """x: (N, 1) f32, weight: (1, 1) f32, bias: (1,) f32 -> (N, 1) f32."""
    n = x.shape[0]
    w = weight.reshape(()).astype(jnp.float32)
    b = bias.reshape(()).astype(jnp.float32)
    x_flat = x.reshape(-1).astype(jnp.float32)

    main_n = (n // LANE) * LANE
    rows = main_n // LANE

    # Small-N bypass: launch overhead dominates; let XLA fuse the affine op.
    if n < min_pallas_elements or rows == 0:
        return (x_flat * w + b).reshape(n, 1)

    # Row tile: <= 2 MiB, multiple of 8 sublanes, and small enough that the
    # grid has >= MIN_GRID_STEPS steps (megacore sharding + pipelining).
    tile_rows = min(MAX_TILE_ROWS, max(8, _round_up(pl.cdiv(rows, MIN_GRID_STEPS), 8)))
    grid = (pl.cdiv(rows, tile_rows),)  # last block may be partial (masked stores)

    wb = jnp.stack([w, b])
    # Zero-cost view when n % LANE == 0 (the common large-N case); otherwise the
    # prefix slice may materialize once (tail itself is < LANE elements).
    slab = x_flat[:main_n].reshape(rows, LANE)

    out_slab = pl.pallas_call(
        linear_regression_kernel,
        out_shape=jax.ShapeDtypeStruct((rows, LANE), jnp.float32),
        grid=grid,
        in_specs=[
            pl.BlockSpec(memory_space=pltpu.SMEM),              # [w, b] scalars
            pl.BlockSpec((tile_rows, LANE), lambda i: (i, 0)),  # x row tile
        ],
        out_specs=pl.BlockSpec((tile_rows, LANE), lambda i: (i, 0)),
        compiler_params=pltpu.CompilerParams(
            dimension_semantics=("parallel",),
        ),
        cost_estimate=pl.CostEstimate(
            flops=2 * rows * LANE,
            transcendentals=0,
            bytes_accessed=2 * rows * LANE * 4,
        ),
    )(wb, slab)

    main_out = out_slab.reshape(main_n)  # zero-cost
    if main_n == n:
        return main_out.reshape(n, 1)

    # Ragged tail (< LANE elements): tiny plain-jnp epilogue.
    tail_out = x_flat[main_n:] * w + b
    return jnp.concatenate([main_out, tail_out]).reshape(n, 1)


if __name__ == "__main__":
    key = jax.random.PRNGKey(0)
    k_y, k_n, k_w, k_b, k_big = jax.random.split(key, 5)

    # Mirror the original script's data construction (size=500):
    # y ~ Uniform(-10, 10), noise ~ Normal(0, 1), x = y + noise  (shape (N, 1))
    N = 500
    y = jax.random.uniform(k_y, (N, 1), minval=-10.0, maxval=10.0, dtype=jnp.float32)
    noise = jax.random.normal(k_n, (N, 1), dtype=jnp.float32)
    x = y + noise

    # Deterministic parameter init for nn.Linear(1, 1).
    weight = jax.random.uniform(k_w, (1, 1), minval=-1.0, maxval=1.0, dtype=jnp.float32)
    bias = jax.random.uniform(k_b, (1,), minval=-1.0, maxval=1.0, dtype=jnp.float32)

    def ref_fn(a):
        return a @ weight.T + bias  # torch.nn.Linear semantics

    # 1) Module-sized input (N=500): takes the fused-XLA small-N bypass.
    out_small = jax.block_until_ready(linear_regression_forward(x, weight, bias))
    assert out_small.shape == (N, 1)
    assert jnp.allclose(out_small, ref_fn(x), atol=1e-5), "small-N mismatch"

    # 2) Force the Pallas path: multi-step grid with a partial last block, no tail.
    n_exact = 40 * LANE  # 20480 elems -> rows=40, tile_rows=16, grid=(3,)
    x_exact = jax.random.normal(k_big, (n_exact, 1), dtype=jnp.float32) * 10.0
    out_exact = jax.block_until_ready(
        linear_regression_forward(x_exact, weight, bias, min_pallas_elements=0)
    )
    assert out_exact.shape == (n_exact, 1)
    assert jnp.allclose(out_exact, ref_fn(x_exact), atol=1e-5), "pallas-path mismatch"

    # 3) Force the Pallas path with a ragged tail (jnp epilogue).
    n_ragged = 40 * LANE + 100
    x_ragged = jax.random.normal(k_big, (n_ragged, 1), dtype=jnp.float32) * 10.0
    out_ragged = jax.block_until_ready(
        linear_regression_forward(x_ragged, weight, bias, min_pallas_elements=0)
    )
    assert out_ragged.shape == (n_ragged, 1)
    assert jnp.allclose(out_ragged, ref_fn(x_ragged), atol=1e-5), "ragged-tail mismatch"

    print("KERNEL_OK")
</pallas_src>

<mosaic_0001>
module attributes {stable_mosaic.version = 11 : i64} {
  func.func @linear_regression_kernel(%arg0: i32, %arg1: memref<2xf32, #tpu.memory_space<smem>>, %arg2: memref<16x512xf32, #tpu.memory_space<vmem>>, %arg3: memref<16x512xf32, #tpu.memory_space<vmem>>) attributes {dimension_semantics = [#tpu.dimension_semantics<parallel>], iteration_bounds = array<i64: 3>, scalar_prefetch = 0 : i64, scratch_operands = 0 : i64, tpu.core_type = #tpu.core_type<tc>, window_params = [{transform_indices = @transform_0, window_bounds = array<i64: 2>}, {transform_indices = @transform_1, window_bounds = array<i64: 16, 512>}, {transform_indices = @transform_2, window_bounds = array<i64: 16, 512>}]} {
    %c0 = arith.constant 0 : index
    %0 = memref.load %arg1[%c0] : memref<2xf32, #tpu.memory_space<smem>>
    %c1 = arith.constant 1 : index
    %1 = memref.load %arg1[%c1] : memref<2xf32, #tpu.memory_space<smem>>
    %c0_0 = arith.constant 0 : index
    %c0_1 = arith.constant 0 : index
    %2 = vector.load %arg2[%c0_0, %c0_1] : memref<16x512xf32, #tpu.memory_space<vmem>>, vector<16x512xf32>
    %3 = vector.broadcast %0 : f32 to vector<16x512xf32>
    %4 = arith.mulf %2, %3 : vector<16x512xf32>
    %5 = vector.broadcast %1 : f32 to vector<16x512xf32>
    %6 = arith.addf %4, %5 : vector<16x512xf32>
    %c0_2 = arith.constant 0 : index
    %c0_3 = arith.constant 0 : index
    %7 = vector.load %arg3[%c0_2, %c0_3] : memref<16x512xf32, #tpu.memory_space<vmem>>, vector<16x512xf32>
    tpu.vector_store %arg3[%c0_2, %c0_3], %6 {strides = array<i32>} : memref<16x512xf32, #tpu.memory_space<vmem>>, vector<16x512xf32>,
    return
  }
  func.func @transform_0(%arg0: i32) -> i32 {
    %c0_i32 = arith.constant 0 : i32
    %c0_i32_0 = arith.constant 0 : i32
    return %c0_i32 : i32
  }
  func.func @transform_1(%arg0: i32) -> (i32, i32) {
    %c0_i32 = arith.constant 0 : i32
    %c0_i32_0 = arith.constant 0 : i32
    return %arg0, %c0_i32 : i32, i32
  }
  func.func @transform_2(%arg0: i32) -> (i32, i32) {
    %c0_i32 = arith.constant 0 : i32
    %c0_i32_0 = arith.constant 0 : i32
    return %arg0, %c0_i32 : i32, i32
  }
}

</mosaic_0001>

<llo_original>
// kernel: tpu_custom_call.1
$region0: #{tpu_custom_call.1}
  #allocation0 [shape = 'u32[]', space=smem, size = 0x4, offset = 0x4, fixed_abs, tag = 'smem constant byte address 0x4 - core index']
  #allocation1 [shape = 'u32[72,128]{1,0:T(1,128)}', space=vmem, size = 0x9000, scoped, tag = 'internal scratch']
  %s0 = inlined_call_operand.hbm [shape: f32[2], index: 0, kind: input, shape index: {}]
  %s1 = inlined_call_operand.hbm [shape: f32[40,512], index: 1, kind: input, shape index: {}]
  %s2 = inlined_call_operand.hbm [shape: f32[40,512], index: 2, kind: output, shape index: {}]
  %s3 = sld [smem:[#allocation0]]
  $region49: #{tpu_custom_call.1} parent=0
    _
  %s5 = ssub.s32 1, %s3
  %s6 = scalar_select 0, %s5, %s3
  $region1: #{tpu_custom_call.1} parent=0
    #allocation2 [shape = 'u8[512]{0}', space=smem, size = 0x200, scoped, tag = 'input window, operand 0, single buffered']
    #allocation3 [shape = 's32[2]{0}', space=sflag, size = 0x8, scoped, tag = 'scoped memory for tpu_custom_call.1']
    #allocation4 [shape = 's32[2]{0}', space=sflag, size = 0x8, scoped, tag = 'scoped memory for tpu_custom_call.1']
    #allocation5 [shape = 's32[2]{0}', space=sflag, size = 0x8, scoped, tag = 'scoped memory for tpu_custom_call.1']
    #allocation6 [shape = 'u8[65536]{0}', space=vmem, size = 0x10000, scoped, tag = 'input window, operand 1']
    #allocation7 [shape = 'u8[65536]{0}', space=vmem, size = 0x10000, scoped, tag = 'output window, operand 0']
    %7 = vsyncpa [#allocation5], 0
    %8 = vsyncpa [#allocation3], 0
    %s9 = scalar_lea.sflag [#allocation3], 1
    %10 = vsyncpa %s9, 0
    %11 = vsyncpa [#allocation4], 0
    %s12 = scalar_lea.sflag [#allocation4], 1
    %13 = vsyncpa %s12, 0
    loop: start=0, step=1, limit=5
    $region2: #{tpu_custom_call.1} parent=1 // loop_pre_header
      _
    $region3: #{tpu_custom_call.1} parent=1 // loop_header
      %s15 = sphi 0, %s19
      %p16 = scmp.ge.s32.totalorder %s15, 5
      %s23 = sphi 0, %s23
      %s25 = sphi 0, %s23
      %s26 = sphi 0, %s25
      %s40 = sphi 0, %s26
      %s46 = sphi 0, %s48
      %s49 = sphi 0, %s46
      %s50 = sphi 0, %s49
      %s66 = sphi 0, %s50
      %s72 = sphi 0, %s74
      %s75 = sphi 0, %s72
      %s76 = sphi 0, %s75
      %s92 = sphi 0, %s76
    $region4: #{tpu_custom_call.1} parent=1 // loop_header_branch
      %18 = sbr.rel (%p16) target = $region8
    $region5: #{tpu_custom_call.1} parent=1 // loop_body
      %s20 = ssub.s32 %s15, 1
      %s21 = ssub.s32 %s15, 2
      %s22 = sadd.s32 %s15, 1
      %s24 = sadd.s32 %s23, 1
      %p27 = scmp.eq.s32.totalorder %s15, 2
      %p28 = scmp.ne.s32.totalorder %s23, %s25
      %p29 = scmp.eq.s32.totalorder %s15, 0
      %p30 = por %p28, %p29
      %p31 = scmp.ne.s32.totalorder %s23, %s25
      %p32 = scmp.eq.s32.totalorder %s20, 2
      %p33 = por %p31, %p32
      %p34 = scmp.ne.s32.totalorder %s25, %s26
      %p35 = scmp.eq.s32.totalorder %s20, 0
      %p36 = por %p34, %p35
      %p37 = scmp.ne.s32.totalorder %s25, %s26
      %p38 = scmp.eq.s32.totalorder %s21, 2
      %p39 = por %p37, %p38
      %p41 = scmp.ne.s32.totalorder %s26, %s40
      %p42 = scmp.eq.s32.totalorder %s21, 0
      %p43 = por %p41, %p42
      %s44 = ssub.s32 %s15, %s22
      %p45 = scmp.eq.s32.totalorder %s44, 0
      %s47 = sadd.s32 %s46, 1
      %s48 = scalar_select %p45, %s46, %s47
      %p51 = pneg %p45
      %p52 = scmp.eq.s32.totalorder %s15, 2
      %p53 = por %p51, %p52
      %p54 = scmp.ne.s32.totalorder %s46, %s49
      %p55 = scmp.eq.s32.totalorder %s15, 0
      %p56 = por %p54, %p55
      %p57 = scmp.ne.s32.totalorder %s46, %s49
      %p58 = scmp.eq.s32.totalorder %s20, 2
      %p59 = por %p57, %p58
      %p60 = scmp.ne.s32.totalorder %s49, %s50
      %p61 = scmp.eq.s32.totalorder %s20, 0
      %p62 = por %p60, %p61
      %p63 = scmp.ne.s32.totalorder %s49, %s50
      %p64 = scmp.eq.s32.totalorder %s21, 2
      %p65 = por %p63, %p64
      %p67 = scmp.ne.s32.totalorder %s50, %s66
      %p68 = scmp.eq.s32.totalorder %s21, 0
      %p69 = por %p67, %p68
      %s70 = ssub.s32 %s15, %s22
      %p71 = scmp.eq.s32.totalorder %s70, 0
      %s73 = sadd.s32 %s72, 1
      %s74 = scalar_select %p71, %s72, %s73
      %p77 = pneg %p71
      %p78 = scmp.eq.s32.totalorder %s15, 2
      %p79 = por %p77, %p78
      %p80 = scmp.ne.s32.totalorder %s72, %s75
      %p81 = scmp.eq.s32.totalorder %s15, 0
      %p82 = por %p80, %p81
      %p83 = scmp.ne.s32.totalorder %s72, %s75
      %p84 = scmp.eq.s32.totalorder %s20, 2
      %p85 = por %p83, %p84
      %p86 = scmp.ne.s32.totalorder %s75, %s76
      %p87 = scmp.eq.s32.totalorder %s20, 0
      %p88 = por %p86, %p87
      %p89 = scmp.ne.s32.totalorder %s75, %s76
      %p90 = scmp.eq.s32.totalorder %s21, 2
      %p91 = por %p89, %p90
      %p93 = scmp.ne.s32.totalorder %s76, %s92
      %p94 = scmp.eq.s32.totalorder %s21, 0
      %p95 = por %p93, %p94
      %p96 = scmp.le.s32.totalorder 1, %s15
      %p97 = scmp.lt.s32.totalorder %s15, 4
      %p98 = pnand %p96, %p97
      %p99 = pneg %p98
      // Predicated region
      $region9: #{tpu_custom_call.1} parent=5 // pred_check
        _
      $region10: #{tpu_custom_call.1} parent=5 // pred_check_branch
        %101 = sbr.rel (%p98) target = $region12
      $region11: #{tpu_custom_call.1} parent=5 // pred_region
        %s102 = ssub.s32 %s15, 1
        // Predicated region
        $region13: #{tpu_custom_call.1} parent=11 // pred_check
          %p103 = pneg %p36
        $region14: #{tpu_custom_call.1} parent=11 // pred_check_branch
          %105 = sbr.rel (%p103) target = $region16
        $region15: #{tpu_custom_call.1} parent=11 // pred_region
          %107 = vsyncadd [#allocation5], 0
          %s109 = sshll.u32 %s0, 4
          %s110 = int_to_ptr.hbm [resolvable:$true] %s109
          %112 = dma.hbm_to_smem %s110, 16, [#allocation2], [#allocation5]
        $region16: #{tpu_custom_call.1} parent=11 // pred_fallthru
          _
      $region12: #{tpu_custom_call.1} parent=5 // pred_fallthru
        _
      %p113 = scmp.lt.s32.totalorder %s15, 3
      // Predicated region
      $region17: #{tpu_custom_call.1} parent=5 // pred_check
        %p114 = pneg %p113
      $region18: #{tpu_custom_call.1} parent=5 // pred_check_branch
        %116 = sbr.rel (%p114) target = $region20
      $region19: #{tpu_custom_call.1} parent=5 // pred_region
        // Predicated region
        $region21: #{tpu_custom_call.1} parent=19 // pred_check
          %p117 = pneg %p56
        $region22: #{tpu_custom_call.1} parent=19 // pred_check_branch
          %119 = sbr.rel (%p117) target = $region24
        $region23: #{tpu_custom_call.1} parent=19 // pred_region
          %s120 = sand.u32 %s46, 1
          %s121 = scalar_lea.sflag [#allocation3], %s120
          %s122 = sand.u32 %s46, 1
          %s123 = smul.addr %s122, 64
          %s124 = scalar_lea.vmem [#allocation6], %s123
          %s125 = smul.u32 2, %s15
          %s126 = ssub.s32 5, %s125
          %p127 = scmp.lt.s32.totalorder %s126, 2
          %s128 = scalar_select %p127, %s126, 2
          %s129 = smul.u32 8, %s128
          %s130 = smul.u32 %s129, 4
          %s131 = ssub.s32 64, %s130
          %s132 = sshll.u32 %s131, 4
          %133 = vsyncadd %s121, %s132
          %p134 = scmp.ne.s32.totalorder 0, %s130
          %s135 = smul.addr %s125, 4
          %s136 = smul.addr %s135, 8
          %s137 = scalar_lea.hbm %s1, %s136
          %s138 = smul.u32 32, %s128
          %s139 = sshll.u32 %s137, 4
          %s140 = int_to_ptr.hbm [resolvable:$true] %s139
          %s141 = sshll.u32 %s124, 4
          %s142 = int_to_ptr.vmem [resolvable:$true] %s141
          %s143 = sshll.u32 %s138, 4
          %147 = dma.hbm_to_vmem [thread:$0]  (%p134), %s140, %s143, %s142, %s121, 512, 512, 32
        $region24: #{tpu_custom_call.1} parent=19 // pred_fallthru
          _
      $region20: #{tpu_custom_call.1} parent=5 // pred_fallthru
        _
      %p148 = scmp.le.s32.totalorder 1, %s15
      %p149 = scmp.lt.s32.totalorder %s15, 4
      %p150 = pnand %p148, %p149
      %p151 = pneg %p150
      // Predicated region
      $region25: #{tpu_custom_call.1} parent=5 // pred_check
        _
      $region26: #{tpu_custom_call.1} parent=5 // pred_check_branch
        %153 = sbr.rel (%p150) target = $region28
      $region27: #{tpu_custom_call.1} parent=5 // pred_region
        %s154 = ssub.s32 %s15, 1
        // Predicated region
        $region29: #{tpu_custom_call.1} parent=27 // pred_check
          %p155 = pneg %p36
        $region30: #{tpu_custom_call.1} parent=27 // pred_check_branch
          %157 = sbr.rel (%p155) target = $region32
        $region31: #{tpu_custom_call.1} parent=27 // pred_region
          %159 = dma.done [#allocation5], 16
        $region32: #{tpu_custom_call.1} parent=27 // pred_fallthru
          _
        %s160 = sand.u32 %s49, 1
        %s161 = scalar_lea.sflag [#allocation3], %s160
        %s162 = sand.u32 %s49, 1
        %s163 = smul.addr %s162, 64
        %s164 = scalar_lea.vmem [#allocation6], %s163
        // Predicated region
        $region33: #{tpu_custom_call.1} parent=27 // pred_check
          %p165 = pneg %p62
        $region34: #{tpu_custom_call.1} parent=27 // pred_check_branch
          %167 = sbr.rel (%p165) target = $region36
        $region35: #{tpu_custom_call.1} parent=27 // pred_region
          %169 = dma.done %s161, 1024
        $region36: #{tpu_custom_call.1} parent=27 // pred_fallthru
          _
        %170 = sfence
        %p171 = pneg %p36
        %p172 = pneg %p33
        %s173 = sand.u32 %s49, 1
        %s174 = scalar_lea.sflag [#allocation3], %s173
        %s175 = sand.u32 %s49, 1
        %s176 = smul.addr %s175, 64
        %s177 = scalar_lea.vmem [#allocation6], %s176
        %p178 = pneg %p62
        %p179 = pneg %p59
        %p180 = pneg %p88
        %p181 = pneg %p85
        %s182 = sand.u32 %s75, 1
        %s183 = scalar_lea.sflag [#allocation4], %s182
        %s184 = sand.u32 %s75, 1
        %s185 = smul.addr %s184, 64
        %s186 = scalar_lea.vmem [#allocation7], %s185
        %s187 = smul.u32 2, %s20
        %s188 = ssub.s32 5, %s187
        %p189 = scmp.lt.s32.totalorder %s188, 2
        %s190 = scalar_select %p189, %s188, 2
        %s191 = smul.u32 8, %s190
        %s192 = smul.u32 %s191, 4
        %s193 = smul.u32 2, %s20
        %s194 = ssub.s32 5, %s193
        %p195 = scmp.lt.s32.totalorder %s194, 2
        %s196 = scalar_select %p195, %s194, 2
        %s197 = smul.u32 8, %s196
        %s198 = smul.u32 %s197, 4
        %s199 = sld [smem:[#allocation2]]
        %s200 = sld [smem:[#allocation2 + $0x1]]
        %v201 = vld [vmem:[%s164] sm:$0xff]
        %v202 = vld [vmem:[%s164 + $0x8] sm:$0xff]
        %v203 = vld [vmem:[%s164 + $0x10] sm:$0xff]
        %v204 = vld [vmem:[%s164 + $0x18] sm:$0xff]
        %v205 = vld [vmem:[%s164 + $0x20] sm:$0xff]
        %v206 = vld [vmem:[%s164 + $0x28] sm:$0xff]
        %v207 = vld [vmem:[%s164 + $0x30] sm:$0xff]
        %v208 = vld [vmem:[%s164 + $0x38] sm:$0xff]
        %v209 = vstv %s199
        %v210 = vmul.f32 %v201, %v209
        %v211 = vmul.f32 %v202, %v209
        %v212 = vmul.f32 %v203, %v209
        %v213 = vmul.f32 %v204, %v209
        %v214 = vmul.f32 %v205, %v209
        %v215 = vmul.f32 %v206, %v209
        %v216 = vmul.f32 %v207, %v209
        %v217 = vmul.f32 %v208, %v209
        %v218 = vstv %s200
        %v219 = vadd.f32 %v210, %v218
        %v220 = vadd.f32 %v211, %v218
        %v221 = vadd.f32 %v212, %v218
        %v222 = vadd.f32 %v213, %v218
        %v223 = vadd.f32 %v214, %v218
        %v224 = vadd.f32 %v215, %v218
        %v225 = vadd.f32 %v216, %v218
        %v226 = vadd.f32 %v217, %v218
        %227 = vst [vmem:[%s186] sm:$0xff] %v219
        %228 = vst [vmem:[%s186 + $0x8] sm:$0xff] %v220
        %229 = vst [vmem:[%s186 + $0x10] sm:$0xff] %v221
        %230 = vst [vmem:[%s186 + $0x18] sm:$0xff] %v222
        %231 = vst [vmem:[%s186 + $0x20] sm:$0xff] %v223
        %232 = vst [vmem:[%s186 + $0x28] sm:$0xff] %v224
        %233 = vst [vmem:[%s186 + $0x30] sm:$0xff] %v225
        %234 = vst [vmem:[%s186 + $0x38] sm:$0xff] %v226
        %s235 = sand.u32 %s75, 1
        %s236 = scalar_lea.sflag [#allocation4], %s235
        %s237 = sand.u32 %s75, 1
        %s238 = smul.addr %s237, 64
        %s239 = scalar_lea.vmem [#allocation7], %s238
        // Predicated region
        $region37: #{tpu_custom_call.1} parent=27 // pred_check
          %p240 = pneg %p85
        $region38: #{tpu_custom_call.1} parent=27 // pred_check_branch
          %242 = sbr.rel (%p240) target = $region40
        $region39: #{tpu_custom_call.1} parent=27 // pred_region
          %s243 = smul.u32 2, %s20
          %s244 = ssub.s32 5, %s243
          %p245 = scmp.lt.s32.totalorder %s244, 2
          %s246 = scalar_select %p245, %s244, 2
          %s247 = smul.u32 8, %s246
          %s248 = smul.u32 %s247, 4
          %s249 = ssub.s32 64, %s248
          %s250 = sshll.u32 %s249, 4
          %251 = vsyncadd %s236, %s250
          %p252 = scmp.ne.s32.totalorder 0, %s248
          %s253 = smul.addr %s243, 4
          %s254 = smul.addr %s253, 8
          %s255 = scalar_lea.hbm %s2, %s254
          %s256 = smul.u32 32, %s246
          %s257 = sshll.u32 %s239, 4
          %s258 = int_to_ptr.vmem [resolvable:$true] %s257
          %s259 = sshll.u32 %s255, 4
          %s260 = int_to_ptr.hbm [resolvable:$true] %s259
          %s261 = sshll.u32 %s256, 4
          %265 = dma.vmem_to_hbm [thread:$0]  (%p252), %s258, %s261, %s260, %s236, 512, 512, 32
        $region40: #{tpu_custom_call.1} parent=27 // pred_fallthru
          _
      $region28: #{tpu_custom_call.1} parent=5 // pred_fallthru
        _
      %p266 = scmp.le.s32.totalorder 2, %s15
      // Predicated region
      $region41: #{tpu_custom_call.1} parent=5 // pred_check
        %p267 = pneg %p266
      $region42: #{tpu_custom_call.1} parent=5 // pred_check_branch
        %269 = sbr.rel (%p267) target = $region44
      $region43: #{tpu_custom_call.1} parent=5 // pred_region
        %s270 = ssub.s32 %s15, 2
        // Predicated region
        $region45: #{tpu_custom_call.1} parent=43 // pred_check
          %p271 = pneg %p91
        $region46: #{tpu_custom_call.1} parent=43 // pred_check_branch
          %273 = sbr.rel (%p271) target = $region48
        $region47: #{tpu_custom_call.1} parent=43 // pred_region
          %s274 = sand.u32 %s76, 1
          %s275 = scalar_lea.sflag [#allocation4], %s274
          %s276 = sand.u32 %s76, 1
          %s277 = smul.addr %s276, 64
          %s278 = scalar_lea.vmem [#allocation7], %s277
          %280 = dma.done %s275, 1024
        $region48: #{tpu_custom_call.1} parent=43 // pred_fallthru
          _
      $region44: #{tpu_custom_call.1} parent=5 // pred_fallthru
        _
    $region6: #{tpu_custom_call.1} parent=1 // loop_footer
      %s19 = sadd.s32 1, %s15
    $region7: #{tpu_custom_call.1} parent=1 // loop_footer_branch
      %14 = sbr.rel target = $region3
    $region8: #{tpu_custom_call.1} parent=1 // loop_exit
      _
    %281 = vsyncpa [#allocation3], 1
    %s282 = scalar_lea.sflag [#allocation3], 1
    %283 = vsyncpa %s282, 1
    %284 = vsyncpa [#allocation4], 1
    %s285 = scalar_lea.sflag [#allocation4], 1
    %286 = vsyncpa %s285, 1
    %287 = vsyncpa [#allocation5], 1
    %s288 = scalar_lea.sflag [#allocation5], 1
    %289 = vsyncpa %s288, 1

</llo_original>
